<compile_context>
chip_gen: v7x
topology: tpu7x:2x2x1
jax: 0.10.0
libtpu: 0.0.40
codegen_flags: <defaults>
</compile_context>

<pallas_src>
import jax
import jax.numpy as jnp
from jax.experimental import pallas as pl
from jax.experimental.pallas import tpu as pltpu


def _round_up(x, m):
    return -(-x // m) * m


def alpha_kernel(x_ref, w_ref, b_ref, o_ref):
    """One batch tile, batch mapped to lanes.

    x_ref: [K, Bt]  VMEM  cat([feature_sims, ass_sims], -1), transposed tile
    w_ref: [K, 1]   VMEM  Linear weight column (f32), resident across the grid
    b_ref: [1, 1]   SMEM  Linear bias scalar (f32)
    o_ref: [1, Bt]  VMEM  sigmoid(W @ x + b) lane-dense row tile
    """
    x = x_ref[...].astype(jnp.float32)               # [K, Bt]  explicit f32 compute
    w = w_ref[...]                                   # [K, 1]   lane-broadcasts
    # cat([f, a], -1) @ W^T  ==  sum over K of (x * w)  (exact).
    # Sublane (axis-0) reduction: VALU adds, result is already lane-dense.
    s = jnp.sum(x * w, axis=0, keepdims=True) + b_ref[0, 0]     # [1, Bt]
    o_ref[...] = jax.nn.sigmoid(s).astype(o_ref.dtype)


def alpha_forward(feature_sims, ass_sims, weight, bias, *,
                  max_block_cols=32768, tiny_batch_xla_threshold=0):
    """feature_sims: [B, F], ass_sims: [B, A], weight: [1, F+A] (PyTorch Linear
    layout), bias: [1].  Returns sigmoid(cat([f, a], -1) @ W^T + b): [B, 1]."""
    B, F = feature_sims.shape
    B2, A = ass_sims.shape
    assert B2 == B
    K = F + A
    assert weight.shape == (1, K)
    assert bias.shape == (1,)

    if B <= tiny_batch_xla_threshold:
        # Tiny-batch path: pallas_call fixed overhead dwarfs the work; let XLA fuse.
        x = jnp.concatenate([feature_sims, ass_sims], axis=-1)
        return jax.nn.sigmoid(x @ weight.T + bias).astype(feature_sims.dtype)

    # Layout plumbing (one fused XLA op): merge operands and put batch on lanes.
    x_t = jnp.concatenate([feature_sims, ass_sims], axis=-1).T       # [K, B]
    w_col = weight.reshape(K, 1).astype(jnp.float32)                 # [K, 1]
    b2d = bias.reshape(1, 1).astype(jnp.float32)                     # [1, 1]

    # Batch tile: one step when small; otherwise aim for exactly 2 parallel steps
    # (both TensorCores on v7x via dimension_semantics=("parallel",)), capped so
    # double-buffered tiles stay comfortably inside scoped VMEM on all gens.
    if B <= 1024:
        bt = B                                       # full-dim block (no 128 rule)
    else:
        bt = min(max_block_cols, _round_up(pl.cdiv(B, 2), 128))
    grid = (pl.cdiv(B, bt),)

    # VMEM budget: actual double-buffered lane-dense tiles + resident weight + margin.
    itemsize = jnp.dtype(feature_sims.dtype).itemsize
    k_pad = _round_up(K, 8)
    bt_pad = _round_up(bt, 128)
    in_tile = k_pad * bt_pad * itemsize
    out_tile = 8 * bt_pad * itemsize                 # [1, bt] pads sublane to 8
    w_tile = k_pad * 128 * 4
    vmem_need = 2 * (in_tile + out_tile) + w_tile
    vmem_limit = int(min(32 << 20, max(4 << 20, vmem_need + (1 << 20))))

    out_row = pl.pallas_call(
        alpha_kernel,
        out_shape=jax.ShapeDtypeStruct((1, B), feature_sims.dtype),
        grid=grid,
        in_specs=[
            pl.BlockSpec((K, bt), lambda i: (0, i)),             # merged input tile
            pl.BlockSpec((K, 1), lambda i: (0, 0)),              # weight (resident)
            pl.BlockSpec((1, 1), lambda i: (0, 0),
                         memory_space=pltpu.MemorySpace.SMEM),   # bias scalar
        ],
        out_specs=pl.BlockSpec((1, bt), lambda i: (0, i)),       # lane-dense row
        compiler_params=pltpu.CompilerParams(
            dimension_semantics=("parallel",),    # shard batch tiles across TCs (v7x)
            vmem_limit_bytes=vmem_limit,
        ),
    )(x_t, w_col, b2d)

    return out_row.reshape(B, 1)


if __name__ == "__main__":
    key = jax.random.PRNGKey(0)
    kf, ka, kw, kb = jax.random.split(key, 4)

    B = 8            # small batch consistent with the module's use
    F_DIM = 16       # feature_sims width
    A_DIM = 16       # ass_sims width
    IN_C = F_DIM + A_DIM

    feature_sims = jax.random.normal(kf, (B, F_DIM), dtype=jnp.float32)
    ass_sims = jax.random.normal(ka, (B, A_DIM), dtype=jnp.float32)
    weight = jax.random.normal(kw, (1, IN_C), dtype=jnp.float32) * 0.1
    bias = jax.random.normal(kb, (1,), dtype=jnp.float32) * 0.1

    out = jax.block_until_ready(alpha_forward(feature_sims, ass_sims, weight, bias))
    ref = jax.nn.sigmoid(
        jnp.concatenate([feature_sims, ass_sims], axis=-1) @ weight.T + bias)
    assert out.shape == (B, 1)
    assert jnp.allclose(out, ref, atol=1e-5, rtol=1e-5)

    # Tiled / pipelined multi-step grid path with a non-divisible batch
    # (locks in remainder-block masking behavior, per review).
    B_LARGE = 4100
    f2 = jax.random.normal(kf, (B_LARGE, F_DIM), dtype=jnp.float32)
    a2 = jax.random.normal(ka, (B_LARGE, A_DIM), dtype=jnp.float32)
    out2 = jax.block_until_ready(alpha_forward(f2, a2, weight, bias))
    ref2 = jax.nn.sigmoid(jnp.concatenate([f2, a2], axis=-1) @ weight.T + bias)
    assert out2.shape == (B_LARGE, 1)
    assert jnp.allclose(out2, ref2, atol=1e-5, rtol=1e-5)

    print("KERNEL_OK")
</pallas_src>

<mosaic_0001>
module attributes {stable_mosaic.version = 11 : i64} {
  func.func @alpha_kernel(%arg0: i32, %arg1: memref<32x8xf32, #tpu.memory_space<vmem>>, %arg2: memref<32x1xf32, #tpu.memory_space<vmem>>, %arg3: memref<1x1xf32, #tpu.memory_space<smem>>, %arg4: memref<1x8xf32, #tpu.memory_space<vmem>>) attributes {dimension_semantics = [#tpu.dimension_semantics<parallel>], iteration_bounds = array<i64: 1>, scalar_prefetch = 0 : i64, scratch_operands = 0 : i64, tpu.core_type = #tpu.core_type<tc>, window_params = [{transform_indices = @transform_0, window_bounds = array<i64: 32, 8>}, {pipeline_mode = #tpu.pipeline_mode<synchronous>, transform_indices = @transform_1, window_bounds = array<i64: 32, 1>}, {transform_indices = @transform_2, window_bounds = array<i64: 1, 1>}, {transform_indices = @transform_3, window_bounds = array<i64: 1, 8>}]} {
    %c0 = arith.constant 0 : index
    %c0_0 = arith.constant 0 : index
    %0 = vector.load %arg1[%c0, %c0_0] : memref<32x8xf32, #tpu.memory_space<vmem>>, vector<32x8xf32>
    %c0_1 = arith.constant 0 : index
    %c0_2 = arith.constant 0 : index
    %1 = vector.load %arg2[%c0_1, %c0_2] : memref<32x1xf32, #tpu.memory_space<vmem>>, vector<32x1xf32>
    %2 = vector.broadcast %1 : vector<32x1xf32> to vector<32x8xf32>
    %3 = arith.mulf %0, %2 : vector<32x8xf32>
    %cst = arith.constant dense<0.000000e+00> : vector<8xf32>
    %4 = vector.multi_reduction <add>, %3, %cst [0] : vector<32x8xf32> to vector<8xf32>
    %5 = vector.shape_cast %4 : vector<8xf32> to vector<1x8xf32>
    %c0_3 = arith.constant 0 : index
    %c0_4 = arith.constant 0 : index
    %6 = memref.load %arg3[%c0_3, %c0_4] : memref<1x1xf32, #tpu.memory_space<smem>>
    %7 = vector.broadcast %6 : f32 to vector<1x8xf32>
    %8 = arith.addf %5, %7 : vector<1x8xf32>
    %9 = arith.negf %8 : vector<1x8xf32>
    %10 = math.exp %9 : vector<1x8xf32>
    %cst_5 = arith.constant 1.000000e+00 : f32
    %11 = vector.broadcast %cst_5 : f32 to vector<1x8xf32>
    %12 = arith.addf %11, %10 : vector<1x8xf32>
    %13 = arith.divf %11, %12 : vector<1x8xf32>
    %c0_6 = arith.constant 0 : index
    %c0_7 = arith.constant 0 : index
    %14 = vector.load %arg4[%c0_6, %c0_7] : memref<1x8xf32, #tpu.memory_space<vmem>>, vector<1x8xf32>
    tpu.vector_store %arg4[%c0_6, %c0_7], %13 {strides = array<i32>} : memref<1x8xf32, #tpu.memory_space<vmem>>, vector<1x8xf32>,
    return
  }
  func.func @transform_0(%arg0: i32) -> (i32, i32) {
    %c0_i32 = arith.constant 0 : i32
    %c0_i32_0 = arith.constant 0 : i32
    return %c0_i32, %arg0 : i32, i32
  }
  func.func @transform_1(%arg0: i32) -> (i32, i32) {
    %c0_i32 = arith.constant 0 : i32
    %c0_i32_0 = arith.constant 0 : i32
    %c0_i32_1 = arith.constant 0 : i32
    return %c0_i32, %c0_i32_0 : i32, i32
  }
  func.func @transform_2(%arg0: i32) -> (i32, i32) {
    %c0_i32 = arith.constant 0 : i32
    %c0_i32_0 = arith.constant 0 : i32
    %c0_i32_1 = arith.constant 0 : i32
    return %c0_i32, %c0_i32_0 : i32, i32
  }
  func.func @transform_3(%arg0: i32) -> (i32, i32) {
    %c0_i32 = arith.constant 0 : i32
    %c0_i32_0 = arith.constant 0 : i32
    return %c0_i32, %arg0 : i32, i32
  }
}

</mosaic_0001>

<llo_original>
// kernel: tpu_custom_call.1
$region0: #{tpu_custom_call.1}
  #allocation0 [shape = 'u32[]', space=smem, size = 0x4, offset = 0x4, fixed_abs, tag = 'smem constant byte address 0x4 - core index']
  #allocation1 [shape = 'u32[144,128]{1,0:T(1,128)}', space=vmem, size = 0x12000, scoped, tag = 'internal scratch']
  #allocation2 [shape = 'f32[1,1]{1,0:T(1,128)S(6)}', space=smem, size = 0x200, scoped, tag = 'scoped memory for tpu_custom_call.1']
  %s0 = inlined_call_operand.vmem [shape: f32[32,8], index: 0, kind: input, shape index: {}]
  %s1 = inlined_call_operand.vmem [shape: f32[32,1], index: 1, kind: input, shape index: {}]
  %s2 = inlined_call_operand.<no memory space> [shape: f32[1,1], index: 2, kind: input, shape index: {}]
  %s3 = inlined_call_operand.hbm [shape: f32[1,8], index: 3, kind: output, shape index: {}]
  %s4 = sld [smem:[#allocation0]]
  $region22: #{tpu_custom_call.1} parent=0
    _
  %s6 = ssub.s32 1, %s4
  %s7 = scalar_select 0, %s6, %s4
  %8 = sst [smem:[#allocation2]] %s2
  $region1: #{tpu_custom_call.1} parent=0
    #allocation3 [shape = 'u8[512]{0}', space=vmem, size = 0x400, scoped, tag = 'output window, operand 0, single buffered']
    #allocation4 [shape = 's32[1]{0}', space=sflag, size = 0x4, scoped, tag = 'scoped memory for tpu_custom_call.1']
    %9 = vsyncpa [#allocation4], 0
    // Predicated region
    $region2: #{tpu_custom_call.1} parent=1 // pred_check
      _
    $region3: #{tpu_custom_call.1} parent=1 // pred_check_branch
      %11 = sbr.rel (0) target = $region5
    $region4: #{tpu_custom_call.1} parent=1 // pred_region
      _
    $region5: #{tpu_custom_call.1} parent=1 // pred_fallthru
      _
    // Predicated region
    $region6: #{tpu_custom_call.1} parent=1 // pred_check
      _
    $region7: #{tpu_custom_call.1} parent=1 // pred_check_branch
      %13 = sbr.rel (0) target = $region9
    $region8: #{tpu_custom_call.1} parent=1 // pred_region
      _
    $region9: #{tpu_custom_call.1} parent=1 // pred_fallthru
      _
    // Predicated region
    $region10: #{tpu_custom_call.1} parent=1 // pred_check
      _
    $region11: #{tpu_custom_call.1} parent=1 // pred_check_branch
      %15 = sbr.rel (0) target = $region13
    $region12: #{tpu_custom_call.1} parent=1 // pred_region
      _
    $region13: #{tpu_custom_call.1} parent=1 // pred_fallthru
      _
    %v16 = vld [vmem:[%s0] sm:$0xff]
    %v17 = vld [vmem:[%s0 + $0x8] sm:$0xff]
    %v18 = vld [vmem:[%s0 + $0x10] sm:$0xff]
    %v19 = vld [vmem:[%s0 + $0x18] sm:$0xff]
    %v20 = vld [vmem:[%s1] sm:$0xff]
    %v21 = vld [vmem:[%s1 + $0x8] sm:$0xff]
    %v22 = vld [vmem:[%s1 + $0x10] sm:$0xff]
    %v23 = vld [vmem:[%s1 + $0x18] sm:$0xff]
    %25 = vset.pattern.permute.xlu0 0
    %26 = vperm.xlu0 %25, %v20
    %v27 = vpop.permute.xlu0 %26
    %30 = vset.pattern.permute.xlu0 0
    %31 = vperm.xlu0 %30, %v21
    %v32 = vpop.permute.xlu0 %31
    %35 = vset.pattern.permute.xlu0 0
    %36 = vperm.xlu0 %35, %v22
    %v37 = vpop.permute.xlu0 %36
    %40 = vset.pattern.permute.xlu0 0
    %41 = vperm.xlu0 %40, %v23
    %v42 = vpop.permute.xlu0 %41
    %v44 = vmul.f32 %v16, %v27
    %v45 = vmul.f32 %v17, %v32
    %v46 = vmul.f32 %v18, %v37
    %v47 = vmul.f32 %v19, %v42
    %vm48 = vcmask 64512
    %v49 = vsel %vm48, %v44, 0.0
    %v50 = vsel %vm48, %v45, 0.0
    %v51 = vadd.f32 %v49, %v50
    %v52 = vsel %vm48, %v46, 0.0
    %v53 = vadd.f32 %v51, %v52
    %v54 = vsel %vm48, %v47, 0.0
    %v55 = vadd.f32 %v53, %v54
    %v56 = vrot.slane %v55, 4
    %v57 = vadd.f32 %v55, %v56
    %v58 = vrot.slane %v57, 2
    %v59 = vadd.f32 %v57, %v58
    %v60 = vrot.slane %v59, 1
    %v61 = vadd.f32 %v59, %v60
    %s62 = sld [smem:[#allocation2]]
    %v63 = vstv %s62
    %v64 = vadd.f32 %v61, %v63
    %v65 = vxor.u32 %v64, 2147483648
    %v66 = vmul.f32 %v65, 1.442695
    %v67 = vpow.pop %v66
    %v68 = vadd.f32 %v67, 1.0
    %v69 = vrcp.pop %v68
    %v70 = vmul.f32 1.0, %v69
    %vm71 = vcmask 57344
    %72 = vst.msk [vmem:[#allocation3] sm:$0x1] %vm71, %v70
    // Predicated region
    $region14: #{tpu_custom_call.1} parent=1 // pred_check
      _
    $region15: #{tpu_custom_call.1} parent=1 // pred_check_branch
      %74 = sbr.rel (0) target = $region17
    $region16: #{tpu_custom_call.1} parent=1 // pred_region
      %s76 = ssub.s32 16, 16
      %77 = vsyncadd [#allocation4], %s76
      %s79 = sshll.u32 [#allocation3], 4
      %s80 = int_to_ptr.vmem [resolvable:$true] %s79
      %82 = dma.vmem_to_hbm [thread:$0]  %s80, 16, %s3, [#allocation4]
    $region17: #{tpu_custom_call.1} parent=1 // pred_fallthru
      _
    // Predicated region
    $region18: #{tpu_custom_call.1} parent=1 // pred_check
      _
    $region19: #{tpu_custom_call.1} parent=1 // pred_check_branch
      %84 = sbr.rel (0) target = $region21
    $region20: #{tpu_custom_call.1} parent=1 // pred_region
      %85 = dma.done [#allocation4], 16
    $region21: #{tpu_custom_call.1} parent=1 // pred_fallthru
      _
    %86 = vsyncpa [#allocation4], 1

</llo_original>
